<compile_context>
chip_gen: v7x
topology: tpu7x:2x2x1
jax: 0.10.0
libtpu: 0.0.40
codegen_flags: <defaults>
</compile_context>

<pallas_src>
import functools

import jax
import jax.numpy as jnp
from jax.experimental import pallas as pl
from jax.experimental.pallas import tpu as pltpu

LANE = 128      # vreg lane width
SUBLANE = 8     # f32 sublane count


def _round_up(n, m):
    return ((n + m - 1) // m) * m


def mlp_kernel(x_ref, w1_ref, b1_ref, w2_ref, b2_ref, w3_ref, b3_ref, o_ref, xpad_ref):
    f_in = x_ref.shape[1]
    # Zero-extend the narrow f32 input block to 128 lanes inside VMEM.  The pad lanes must
    # be real zeros (stale VMEM could hold NaN/Inf bit patterns that would poison 0*x), so
    # re-zero the scratch every step (cheap VMEM-only writes; safe under "parallel"
    # semantics where step 0 may run on a different core).
    xpad_ref[...] = jnp.zeros_like(xpad_ref)
    xpad_ref[:, :f_in] = x_ref[...]
    x = xpad_ref[...].astype(jnp.bfloat16)                              # (tm, 128) bf16

    # bf16 operands on the MXU, f32 accumulation; elementwise math in f32.
    h1 = jnp.dot(x, w1_ref[...], preferred_element_type=jnp.float32) + b1_ref[...]
    h1 = jnp.maximum(h1, 0.0)
    h2 = jnp.dot(h1.astype(jnp.bfloat16), w2_ref[...],
                 preferred_element_type=jnp.float32) + b2_ref[...]
    h2 = jnp.maximum(h2, 0.0)
    y = jnp.dot(h2.astype(jnp.bfloat16), w3_ref[...],
                preferred_element_type=jnp.float32) + b3_ref[...]
    # Narrow store: only the real output columns go back to HBM (~12 B/row).
    o_ref[...] = y[:, :o_ref.shape[1]].astype(o_ref.dtype)


def init_params(key, in_features=4, h1=8, h2=9, out_features=3):
    """PyTorch nn.Linear-style init (uniform +/- 1/sqrt(fan_in)); W stored as (in, out)."""
    ks = jax.random.split(key, 6)

    def lin(kw, kb, fan_in, fan_out):
        bound = 1.0 / jnp.sqrt(fan_in)
        w = jax.random.uniform(kw, (fan_in, fan_out), jnp.float32, -bound, bound)
        b = jax.random.uniform(kb, (1, fan_out), jnp.float32, -bound, bound)
        return w, b

    w1, b1 = lin(ks[0], ks[1], in_features, h1)
    w2, b2 = lin(ks[2], ks[3], h1, h2)
    w3, b3 = lin(ks[4], ks[5], h2, out_features)
    return {"w1": w1, "b1": b1, "w2": w2, "b2": b2, "w3": w3, "b3": b3}


def pad_params(params):
    """Zero-pad weight/bias feature dims to 128 lanes once; weights -> bf16 MXU operands.

    Zero padding is semantics-preserving: padded weight rows/cols and bias lanes are 0, so
    extra lanes carry exact zeros through ReLU and contribute nothing downstream.
    """
    def pad_w(w):
        fi, fo = w.shape
        wp = jnp.zeros((_round_up(fi, LANE), _round_up(fo, LANE)), jnp.float32)
        wp = wp.at[:fi, :fo].set(w)
        return wp.astype(jnp.bfloat16)

    def pad_b(b):
        fo = b.shape[-1]
        bp = jnp.zeros((1, _round_up(fo, LANE)), jnp.float32)
        return bp.at[:, :fo].set(b.reshape(1, -1))      # bias stays f32 for the f32 add

    return {
        "w1": pad_w(params["w1"]), "b1": pad_b(params["b1"]),
        "w2": pad_w(params["w2"]), "b2": pad_b(params["b2"]),
        "w3": pad_w(params["w3"]), "b3": pad_b(params["b3"]),
    }


@functools.partial(jax.jit, static_argnames=("out_features", "block_rows"))
def mlp_forward(x, p, *, out_features, block_rows=2048):
    """x: (B, in_features) f32 (raw, unpadded). p: pad_params() output. -> (B, out_features) f32."""
    B, f_in = x.shape

    # Pad rows only to a multiple of 8 sublanes, then pick tm as an ~divisor of that so
    # total padding waste stays < one sublane group per step; keep >= 4 grid steps when the
    # batch allows (pipelining everywhere; both TensorCores busy on v7x).
    b_pad8 = _round_up(max(B, SUBLANE), SUBLANE)
    n_steps = max(pl.cdiv(b_pad8, block_rows), 1)
    n_steps = max(n_steps, max(min(4, b_pad8 // SUBLANE), 1))
    tm = _round_up(pl.cdiv(b_pad8, n_steps), SUBLANE)
    b_pad = tm * n_steps

    if b_pad != B:
        # Tiny pad: 16 B/row, no lane widening here (lane widening happens in-kernel).
        x = jnp.pad(x, ((0, b_pad - B), (0, 0)))

    def batch_spec(cols):
        # Tiled along batch; double-buffered by the Pallas pipeline.  Legal because the
        # last block dim equals the full (narrow) array dim and tm is a multiple of 8.
        return pl.BlockSpec((tm, cols), lambda i: (i, 0),
                            memory_space=pltpu.MemorySpace.VMEM)

    def resident_spec(shape):
        # Whole (padded) weight/bias stays VMEM-resident across all grid steps.
        return pl.BlockSpec(shape, lambda i: (0,) * len(shape),
                            memory_space=pltpu.MemorySpace.VMEM)

    out_p = pl.pallas_call(
        mlp_kernel,
        out_shape=jax.ShapeDtypeStruct((b_pad, out_features), jnp.float32),
        grid=(n_steps,),
        in_specs=[
            batch_spec(f_in),
            resident_spec(p["w1"].shape), resident_spec(p["b1"].shape),
            resident_spec(p["w2"].shape), resident_spec(p["b2"].shape),
            resident_spec(p["w3"].shape), resident_spec(p["b3"].shape),
        ],
        out_specs=batch_spec(out_features),
        scratch_shapes=[pltpu.VMEM((tm, LANE), jnp.float32)],   # in-kernel lane-padded x
        compiler_params=pltpu.CompilerParams(
            dimension_semantics=("parallel",)),   # 2 TCs on v7x; harmless on v5e/v6e
    )(x, p["w1"], p["b1"], p["w2"], p["b2"], p["w3"], p["b3"])

    return out_p[:B]


def mlp_reference_f32(x, p):
    h1 = jnp.maximum(x @ p["w1"] + p["b1"], 0.0)
    h2 = jnp.maximum(h1 @ p["w2"] + p["b2"], 0.0)
    return h2 @ p["w3"] + p["b3"]


def mlp_reference_bf16(x, p):
    # Same bf16-at-MXU-boundary / f32-accumulate recipe as the kernel.
    def mm(a, w):
        return jnp.dot(a.astype(jnp.bfloat16), w.astype(jnp.bfloat16),
                       preferred_element_type=jnp.float32)
    h1 = jnp.maximum(mm(x, p["w1"]) + p["b1"], 0.0)
    h2 = jnp.maximum(mm(h1, p["w2"]) + p["b2"], 0.0)
    return mm(h2, p["w3"]) + p["b3"]


if __name__ == "__main__":
    key = jax.random.PRNGKey(0)
    k_x, k_p, k_x2 = jax.random.split(key, 3)

    batch, in_features, h1, h2, out_features = 8, 4, 8, 9, 3
    x = jax.random.normal(k_x, (batch, in_features), jnp.float32)
    params = init_params(k_p, in_features, h1, h2, out_features)
    padded = pad_params(params)

    out = mlp_forward(x, padded, out_features=out_features)
    out = jax.block_until_ready(out)

    ref_bf16 = mlp_reference_bf16(x, params)
    ref_f32 = mlp_reference_f32(x, params)

    assert out.shape == (batch, out_features), out.shape
    assert jnp.allclose(out, ref_bf16, atol=1e-3, rtol=1e-3), "mismatch vs bf16-matched reference"
    assert jnp.allclose(out, ref_f32, atol=5e-2, rtol=5e-2), "mismatch vs f32 reference"

    # Second check: batch that is not a tile multiple -> exercises row padding + a
    # multi-step (parallel) grid.
    batch2 = 200
    x2 = jax.random.normal(k_x2, (batch2, in_features), jnp.float32)
    out2 = jax.block_until_ready(mlp_forward(x2, padded, out_features=out_features))
    assert out2.shape == (batch2, out_features), out2.shape
    assert jnp.allclose(out2, mlp_reference_bf16(x2, params), atol=1e-3, rtol=1e-3), \
        "multi-step grid mismatch vs bf16-matched reference"

    print("KERNEL_OK")
</pallas_src>

<mosaic_0001>
module attributes {stable_mosaic.version = 11 : i64} {
  func.func @mlp_kernel(%arg0: i32, %arg1: memref<8x4xf32, #tpu.memory_space<vmem>>, %arg2: memref<128x128xbf16, #tpu.memory_space<vmem>>, %arg3: memref<1x128xf32, #tpu.memory_space<vmem>>, %arg4: memref<128x128xbf16, #tpu.memory_space<vmem>>, %arg5: memref<1x128xf32, #tpu.memory_space<vmem>>, %arg6: memref<128x128xbf16, #tpu.memory_space<vmem>>, %arg7: memref<1x128xf32, #tpu.memory_space<vmem>>, %arg8: memref<8x3xf32, #tpu.memory_space<vmem>>, %arg9: memref<8x128xf32, #tpu.memory_space<vmem>>) attributes {dimension_semantics = [#tpu.dimension_semantics<parallel>], iteration_bounds = array<i64: 1>, scalar_prefetch = 0 : i64, scratch_operands = 1 : i64, tpu.core_type = #tpu.core_type<tc>, window_params = [{transform_indices = @transform_0, window_bounds = array<i64: 8, 4>}, {pipeline_mode = #tpu.pipeline_mode<synchronous>, transform_indices = @transform_1, window_bounds = array<i64: 128, 128>}, {pipeline_mode = #tpu.pipeline_mode<synchronous>, transform_indices = @transform_2, window_bounds = array<i64: 1, 128>}, {pipeline_mode = #tpu.pipeline_mode<synchronous>, transform_indices = @transform_3, window_bounds = array<i64: 128, 128>}, {pipeline_mode = #tpu.pipeline_mode<synchronous>, transform_indices = @transform_4, window_bounds = array<i64: 1, 128>}, {pipeline_mode = #tpu.pipeline_mode<synchronous>, transform_indices = @transform_5, window_bounds = array<i64: 128, 128>}, {pipeline_mode = #tpu.pipeline_mode<synchronous>, transform_indices = @transform_6, window_bounds = array<i64: 1, 128>}, {transform_indices = @transform_7, window_bounds = array<i64: 8, 3>}]} {
    %cst = arith.constant 0.000000e+00 : f32
    %0 = vector.broadcast %cst : f32 to vector<8x128xf32>
    %c0 = arith.constant 0 : index
    %c0_0 = arith.constant 0 : index
    %1 = vector.load %arg9[%c0, %c0_0] : memref<8x128xf32, #tpu.memory_space<vmem>>, vector<8x128xf32>
    tpu.vector_store %arg9[%c0, %c0_0], %0 {strides = array<i32>} : memref<8x128xf32, #tpu.memory_space<vmem>>, vector<8x128xf32>,
    %c0_1 = arith.constant 0 : index
    %c0_2 = arith.constant 0 : index
    %2 = vector.load %arg1[%c0_1, %c0_2] : memref<8x4xf32, #tpu.memory_space<vmem>>, vector<8x4xf32>
    %c0_3 = arith.constant 0 : index
    %c0_4 = arith.constant 0 : index
    %3 = vector.load %arg9[%c0_3, %c0_4] : memref<8x128xf32, #tpu.memory_space<vmem>>, vector<8x4xf32>
    tpu.vector_store %arg9[%c0_3, %c0_4], %2 {strides = array<i32>} : memref<8x128xf32, #tpu.memory_space<vmem>>, vector<8x4xf32>,
    %c0_5 = arith.constant 0 : index
    %c0_6 = arith.constant 0 : index
    %4 = vector.load %arg9[%c0_5, %c0_6] : memref<8x128xf32, #tpu.memory_space<vmem>>, vector<8x128xf32>
    %5 = arith.truncf %4 : vector<8x128xf32> to vector<8x128xbf16>
    %c0_7 = arith.constant 0 : index
    %c0_8 = arith.constant 0 : index
    %6 = vector.load %arg2[%c0_7, %c0_8] : memref<128x128xbf16, #tpu.memory_space<vmem>>, vector<128x128xbf16>
    %cst_9 = arith.constant dense<0.000000e+00> : vector<8x128xf32>
    %7 = tpu.matmul %5, %6, %cst_9 {dimension_numbers = #tpu.dot_dimension_numbers<[1], [0], [0], [1], [0, 0, 1, 1], [], []>} : vector<8x128xbf16>, vector<128x128xbf16>, vector<8x128xf32> -> vector<8x128xf32>
    %c0_10 = arith.constant 0 : index
    %c0_11 = arith.constant 0 : index
    %8 = vector.load %arg3[%c0_10, %c0_11] : memref<1x128xf32, #tpu.memory_space<vmem>>, vector<1x128xf32>
    %9 = vector.broadcast %8 : vector<1x128xf32> to vector<8x128xf32>
    %10 = arith.addf %7, %9 : vector<8x128xf32>
    %cst_12 = arith.constant 0.000000e+00 : f32
    %11 = vector.broadcast %cst_12 : f32 to vector<8x128xf32>
    %12 = arith.maximumf %10, %11 : vector<8x128xf32>
    %13 = arith.truncf %12 : vector<8x128xf32> to vector<8x128xbf16>
    %c0_13 = arith.constant 0 : index
    %c0_14 = arith.constant 0 : index
    %14 = vector.load %arg4[%c0_13, %c0_14] : memref<128x128xbf16, #tpu.memory_space<vmem>>, vector<128x128xbf16>
    %cst_15 = arith.constant dense<0.000000e+00> : vector<8x128xf32>
    %15 = tpu.matmul %13, %14, %cst_15 {dimension_numbers = #tpu.dot_dimension_numbers<[1], [0], [0], [1], [0, 0, 1, 1], [], []>} : vector<8x128xbf16>, vector<128x128xbf16>, vector<8x128xf32> -> vector<8x128xf32>
    %c0_16 = arith.constant 0 : index
    %c0_17 = arith.constant 0 : index
    %16 = vector.load %arg5[%c0_16, %c0_17] : memref<1x128xf32, #tpu.memory_space<vmem>>, vector<1x128xf32>
    %17 = vector.broadcast %16 : vector<1x128xf32> to vector<8x128xf32>
    %18 = arith.addf %15, %17 : vector<8x128xf32>
    %cst_18 = arith.constant 0.000000e+00 : f32
    %19 = vector.broadcast %cst_18 : f32 to vector<8x128xf32>
    %20 = arith.maximumf %18, %19 : vector<8x128xf32>
    %21 = arith.truncf %20 : vector<8x128xf32> to vector<8x128xbf16>
    %c0_19 = arith.constant 0 : index
    %c0_20 = arith.constant 0 : index
    %22 = vector.load %arg6[%c0_19, %c0_20] : memref<128x128xbf16, #tpu.memory_space<vmem>>, vector<128x128xbf16>
    %cst_21 = arith.constant dense<0.000000e+00> : vector<8x128xf32>
    %23 = tpu.matmul %21, %22, %cst_21 {dimension_numbers = #tpu.dot_dimension_numbers<[1], [0], [0], [1], [0, 0, 1, 1], [], []>} : vector<8x128xbf16>, vector<128x128xbf16>, vector<8x128xf32> -> vector<8x128xf32>
    %c0_22 = arith.constant 0 : index
    %c0_23 = arith.constant 0 : index
    %24 = vector.load %arg7[%c0_22, %c0_23] : memref<1x128xf32, #tpu.memory_space<vmem>>, vector<1x128xf32>
    %25 = vector.broadcast %24 : vector<1x128xf32> to vector<8x128xf32>
    %26 = arith.addf %23, %25 : vector<8x128xf32>
    %27 = vector.extract_strided_slice %26 {offsets = [0, 0], sizes = [8, 3], strides = [1, 1]} : vector<8x128xf32> to vector<8x3xf32>
    %c0_24 = arith.constant 0 : index
    %c0_25 = arith.constant 0 : index
    %28 = vector.load %arg8[%c0_24, %c0_25] : memref<8x3xf32, #tpu.memory_space<vmem>>, vector<8x3xf32>
    tpu.vector_store %arg8[%c0_24, %c0_25], %27 {strides = array<i32>} : memref<8x3xf32, #tpu.memory_space<vmem>>, vector<8x3xf32>,
    return
  }
  func.func @transform_0(%arg0: i32) -> (i32, i32) {
    %c0_i32 = arith.constant 0 : i32
    %c0_i32_0 = arith.constant 0 : i32
    return %arg0, %c0_i32 : i32, i32
  }
  func.func @transform_1(%arg0: i32) -> (i32, i32) {
    %c0_i32 = arith.constant 0 : i32
    %c0_i32_0 = arith.constant 0 : i32
    %c0_i32_1 = arith.constant 0 : i32
    return %c0_i32, %c0_i32_0 : i32, i32
  }
  func.func @transform_2(%arg0: i32) -> (i32, i32) {
    %c0_i32 = arith.constant 0 : i32
    %c0_i32_0 = arith.constant 0 : i32
    %c0_i32_1 = arith.constant 0 : i32
    return %c0_i32, %c0_i32_0 : i32, i32
  }
  func.func @transform_3(%arg0: i32) -> (i32, i32) {
    %c0_i32 = arith.constant 0 : i32
    %c0_i32_0 = arith.constant 0 : i32
    %c0_i32_1 = arith.constant 0 : i32
    return %c0_i32, %c0_i32_0 : i32, i32
  }
  func.func @transform_4(%arg0: i32) -> (i32, i32) {
    %c0_i32 = arith.constant 0 : i32
    %c0_i32_0 = arith.constant 0 : i32
    %c0_i32_1 = arith.constant 0 : i32
    return %c0_i32, %c0_i32_0 : i32, i32
  }
  func.func @transform_5(%arg0: i32) -> (i32, i32) {
    %c0_i32 = arith.constant 0 : i32
    %c0_i32_0 = arith.constant 0 : i32
    %c0_i32_1 = arith.constant 0 : i32
    return %c0_i32, %c0_i32_0 : i32, i32
  }
  func.func @transform_6(%arg0: i32) -> (i32, i32) {
    %c0_i32 = arith.constant 0 : i32
    %c0_i32_0 = arith.constant 0 : i32
    %c0_i32_1 = arith.constant 0 : i32
    return %c0_i32, %c0_i32_0 : i32, i32
  }
  func.func @transform_7(%arg0: i32) -> (i32, i32) {
    %c0_i32 = arith.constant 0 : i32
    %c0_i32_0 = arith.constant 0 : i32
    return %arg0, %c0_i32 : i32, i32
  }
}

</mosaic_0001>

<llo_original>
// kernel: mlp_forward.1
$region0: #{mlp_forward.1}
  #allocation0 [shape = 'u32[]', space=smem, size = 0x4, offset = 0x4, fixed_abs, tag = 'smem constant byte address 0x4 - core index']
  #allocation1 [shape = 'u32[144,128]{1,0:T(1,128)}', space=vmem, size = 0x12000, scoped, tag = 'internal scratch']
  #allocation2 [shape = 'f32[8,128]{1,0:T(8,128)}', space=vmem, size = 0x1000, scoped, tag = 'scratch operand']
  %s0 = inlined_call_operand.vmem [shape: f32[8,4], index: 0, kind: input, shape index: {}]
  %s1 = inlined_call_operand.hbm [shape: bf16[128,128], index: 1, kind: input, shape index: {}]
  %s2 = inlined_call_operand.vmem [shape: f32[1,128], index: 2, kind: input, shape index: {}]
  %s3 = inlined_call_operand.hbm [shape: bf16[128,128], index: 3, kind: input, shape index: {}]
  %s4 = inlined_call_operand.vmem [shape: f32[1,128], index: 4, kind: input, shape index: {}]
  %s5 = inlined_call_operand.hbm [shape: bf16[128,128], index: 5, kind: input, shape index: {}]
  %s6 = inlined_call_operand.vmem [shape: f32[1,128], index: 6, kind: input, shape index: {}]
  %s7 = inlined_call_operand.vmem [shape: f32[8,3], index: 7, kind: output, shape index: {}]
  %s8 = sld [smem:[#allocation0]]
  $region50: #{mlp_forward.1} parent=0
    _
  %s10 = ssub.s32 1, %s8
  %s11 = scalar_select 0, %s10, %s8
  $region1: #{mlp_forward.1} parent=0
    #allocation3 [shape = 'u8[32768]{0}', space=vmem, size = 0x8000, scoped, tag = 'input window, operand 1, single buffered']
    #allocation4 [shape = 's32[1]{0}', space=sflag, size = 0x4, scoped, tag = 'scoped memory for mlp_forward.1']
    #allocation5 [shape = 'u8[32768]{0}', space=vmem, size = 0x8000, scoped, tag = 'input window, operand 3, single buffered']
    #allocation6 [shape = 's32[1]{0}', space=sflag, size = 0x4, scoped, tag = 'scoped memory for mlp_forward.1']
    #allocation7 [shape = 'u8[32768]{0}', space=vmem, size = 0x8000, scoped, tag = 'input window, operand 5, single buffered']
    %12 = vsyncpa [#allocation4], 0
    %13 = vsyncpa [#allocation6], 0
    // Predicated region
    $region2: #{mlp_forward.1} parent=1 // pred_check
      _
    $region3: #{mlp_forward.1} parent=1 // pred_check_branch
      %15 = sbr.rel (0) target = $region5
    $region4: #{mlp_forward.1} parent=1 // pred_region
      _
    $region5: #{mlp_forward.1} parent=1 // pred_fallthru
      _
    // Predicated region
    $region6: #{mlp_forward.1} parent=1 // pred_check
      _
    $region7: #{mlp_forward.1} parent=1 // pred_check_branch
      %17 = sbr.rel (0) target = $region9
    $region8: #{mlp_forward.1} parent=1 // pred_region
      %s19 = ssub.s32 1024, 1024
      %20 = vsyncadd [#allocation4], %s19
      %s21 = sshll.u32 [#allocation3], 4
      %s22 = int_to_ptr.vmem [resolvable:$true] %s21
      %27 = dma.hbm_to_vmem [thread:$0]  %s1, 1024, %s22, [#allocation4], 64, 64, 4
    $region9: #{mlp_forward.1} parent=1 // pred_fallthru
      _
    // Predicated region
    $region10: #{mlp_forward.1} parent=1 // pred_check
      _
    $region11: #{mlp_forward.1} parent=1 // pred_check_branch
      %29 = sbr.rel (0) target = $region13
    $region12: #{mlp_forward.1} parent=1 // pred_region
      _
    $region13: #{mlp_forward.1} parent=1 // pred_fallthru
      _
    // Predicated region
    $region14: #{mlp_forward.1} parent=1 // pred_check
      _
    $region15: #{mlp_forward.1} parent=1 // pred_check_branch
      %31 = sbr.rel (0) target = $region17
    $region16: #{mlp_forward.1} parent=1 // pred_region
      %s33 = ssub.s32 1024, 1024
      %34 = vsyncadd [#allocation6], %s33
      %s35 = sshll.u32 [#allocation5], 4
      %s36 = int_to_ptr.vmem [resolvable:$true] %s35
      %41 = dma.hbm_to_vmem [thread:$0]  %s3, 1024, %s36, [#allocation6], 64, 64, 4
    $region17: #{mlp_forward.1} parent=1 // pred_fallthru
      _
    // Predicated region
    $region18: #{mlp_forward.1} parent=1 // pred_check
      _
    $region19: #{mlp_forward.1} parent=1 // pred_check_branch
      %43 = sbr.rel (0) target = $region21
    $region20: #{mlp_forward.1} parent=1 // pred_region
      _
    $region21: #{mlp_forward.1} parent=1 // pred_fallthru
      _
    // Predicated region
    $region22: #{mlp_forward.1} parent=1 // pred_check
      _
    $region23: #{mlp_forward.1} parent=1 // pred_check_branch
      %45 = sbr.rel (0) target = $region25
    $region24: #{mlp_forward.1} parent=1 // pred_region
      %s47 = ssub.s32 1024, 1024
      %48 = vsyncadd [#allocation6], %s47
      %s49 = sshll.u32 [#allocation7], 4
      %s50 = int_to_ptr.vmem [resolvable:$true] %s49
      %55 = dma.hbm_to_vmem [thread:$0]  %s5, 1024, %s50, [#allocation6], 64, 64, 4
    $region25: #{mlp_forward.1} parent=1 // pred_fallthru
      _
    // Predicated region
    $region26: #{mlp_forward.1} parent=1 // pred_check
      _
    $region27: #{mlp_forward.1} parent=1 // pred_check_branch
      %57 = sbr.rel (0) target = $region29
    $region28: #{mlp_forward.1} parent=1 // pred_region
      _
    $region29: #{mlp_forward.1} parent=1 // pred_fallthru
      _
    // Predicated region
    $region30: #{mlp_forward.1} parent=1 // pred_check
      _
    $region31: #{mlp_forward.1} parent=1 // pred_check_branch
      %59 = sbr.rel (0) target = $region33
    $region32: #{mlp_forward.1} parent=1 // pred_region
      %60 = dma.done [#allocation4], 1024
    $region33: #{mlp_forward.1} parent=1 // pred_fallthru
      _
    // Predicated region
    $region34: #{mlp_forward.1} parent=1 // pred_check
      _
    $region35: #{mlp_forward.1} parent=1 // pred_check_branch
      %62 = sbr.rel (0) target = $region37
    $region36: #{mlp_forward.1} parent=1 // pred_region
      %63 = dma.done [#allocation6], 1024
    $region37: #{mlp_forward.1} parent=1 // pred_fallthru
      _
    // Predicated region
    $region38: #{mlp_forward.1} parent=1 // pred_check
      _
    $region39: #{mlp_forward.1} parent=1 // pred_check_branch
      %65 = sbr.rel (0) target = $region41
    $region40: #{mlp_forward.1} parent=1 // pred_region
      %66 = dma.done [#allocation6], 1024
    $region41: #{mlp_forward.1} parent=1 // pred_fallthru
      _
    %68 = vst [vmem:[#allocation2] sm:$0xff] 0.0
    %v69 = vld [vmem:[%s0] sm:$0xff]
    %vm70 = vcmask 31744
    %71 = vst.msk [vmem:[#allocation2] sm:$0xff] %vm70, %v69
    %v72 = vld [vmem:[#allocation2] sm:$0xff]
    %v73 = vpack.c.bf16 %v72, %v72
    %v74 = vld [vmem:[#allocation3] sm:$0xf]
    %v75 = vld [vmem:[#allocation3 + $0x4] sm:$0xf]
    %v76 = vld [vmem:[#allocation3 + $0x8] sm:$0xf]
    %v77 = vld [vmem:[#allocation3 + $0xc] sm:$0xf]
    %v78 = vld [vmem:[#allocation3 + $0x10] sm:$0xf]
    %v79 = vld [vmem:[#allocation3 + $0x14] sm:$0xf]
    %v80 = vld [vmem:[#allocation3 + $0x18] sm:$0xf]
    %v81 = vld [vmem:[#allocation3 + $0x1c] sm:$0xf]
    %v82 = vld [vmem:[#allocation3 + $0x20] sm:$0xf]
    %v83 = vld [vmem:[#allocation3 + $0x24] sm:$0xf]
    %v84 = vld [vmem:[#allocation3 + $0x28] sm:$0xf]
    %v85 = vld [vmem:[#allocation3 + $0x2c] sm:$0xf]
    %v86 = vld [vmem:[#allocation3 + $0x30] sm:$0xf]
    %v87 = vld [vmem:[#allocation3 + $0x34] sm:$0xf]
    %v88 = vld [vmem:[#allocation3 + $0x38] sm:$0xf]
    %v89 = vld [vmem:[#allocation3 + $0x3c] sm:$0xf]
    %v90 = vld [vmem:[%s2] sm:$0x1]
    %v92 = vlaneseq
    %v93 = vshrl.u32 %v92, 7
    %v94 = vsub.s32 0, %v93
    %v95 = vrot.slane %v90, %v94
    %v113 = vunpack.c.l.b16 %v74
    %v114 = vunpack.c.l.b16 %v75
    %v115 = vunpack.c.l.b16 %v76
    %v116 = vunpack.c.l.b16 %v77
    %v117 = vunpack.c.l.b16 %v78
    %v118 = vunpack.c.l.b16 %v79
    %v119 = vunpack.c.l.b16 %v80
    %v120 = vunpack.c.l.b16 %v81
    %v121 = vunpack.c.l.b16 %v82
    %v122 = vunpack.c.l.b16 %v83
    %v123 = vunpack.c.l.b16 %v84
    %v124 = vunpack.c.l.b16 %v85
    %v125 = vunpack.c.l.b16 %v86
    %v126 = vunpack.c.l.b16 %v87
    %v127 = vunpack.c.l.b16 %v88
    %v128 = vunpack.c.l.b16 %v89
    %v129 = vpack.c.b16 %v114, %v113
    %v130 = vpack.c.b16 %v116, %v115
    %v131 = vpack.c.b16 %v118, %v117
    %v132 = vpack.c.b16 %v120, %v119
    %v133 = vpack.c.b16 %v122, %v121
    %v134 = vpack.c.b16 %v124, %v123
    %v135 = vpack.c.b16 %v126, %v125
    %v136 = vpack.c.b16 %v128, %v127
    %145 = vmatprep.subr.bf16.mxu0 0
    %146 = vmatpush1.bf16.msra.mxu0 %v129
    %147 = vmatprep.subr.bf16.mxu0 0
    %148 = vmatpush1.bf16.msra.mxu0 %v130
    %149 = vmatprep.subr.bf16.mxu0 0
    %150 = vmatpush1.bf16.msra.mxu0 %v131
    %151 = vmatprep.subr.bf16.mxu0 0
    %152 = vmatpush1.bf16.msra.mxu0 %v132
    %153 = vmatprep.subr.bf16.mxu0 0
    %154 = vmatpush1.bf16.msra.mxu0 %v133
    %155 = vmatprep.subr.bf16.mxu0 0
    %156 = vmatpush1.bf16.msra.mxu0 %v134
    %157 = vmatprep.subr.bf16.mxu0 0
    %158 = vmatpush1.bf16.msra.mxu0 %v135
    %159 = vmatprep.subr.bf16.mxu0 0
    %160 = vmatpush1.bf16.msra.mxu0 %v136
    %161 = vmatprep.subr.bf16.mxu0 0
    %162 = vmatpush1.bf16.msra.mxu0 0
    %163 = vmatprep.subr.bf16.mxu0 0
    %164 = vmatpush1.bf16.msra.mxu0 0
    %165 = vmatprep.subr.bf16.mxu0 0
    %166 = vmatpush1.bf16.msra.mxu0 0
    %167 = vmatprep.subr.bf16.mxu0 0
    %168 = vmatpush1.bf16.msra.mxu0 0
    %169 = vmatprep.subr.bf16.mxu0 0
    %170 = vmatpush1.bf16.msra.mxu0 0
    %171 = vmatprep.subr.bf16.mxu0 0
    %172 = vmatpush1.bf16.msra.mxu0 0
    %173 = vmatprep.subr.bf16.mxu0 0
    %174 = vmatpush1.bf16.msra.mxu0 0
    %175 = vmatprep.subr.bf16.mxu0 0
    %176 = vmatpush1.bf16.msra.mxu0 0
    %177 = vmatprep.mubr.bf16.mxu0 0
    %178 = vmatmul.mubr.bf16.gmra.mrb[0].mxu0 %v73
    %v179 = vpop.f32.mrb[0].mxu0
    %v180 = vadd.f32 %v95, %v179
    %v181 = vpop.f32.mrb[0].mxu0
    %v182 = vpop.f32.mrb[0].mxu0
    %v183 = vpop.f32.mrb[0].mxu0
    %184 = vdwg.mxu0
    %v185 = vmax.f32 %v180, 0.0
    %v186 = vpack.c.bf16 %v185, %v185
    %v187 = vld [vmem:[#allocation5] sm:$0xf]
    %v188 = vld [vmem:[#allocation5 + $0x4] sm:$0xf]
    %v189 = vld [vmem:[#allocation5 + $0x8] sm:$0xf]
    %v190 = vld [vmem:[#allocation5 + $0xc] sm:$0xf]
    %v191 = vld [vmem:[#allocation5 + $0x10] sm:$0xf]
    %v192 = vld [vmem:[#allocation5 + $0x14] sm:$0xf]
    %v193 = vld [vmem:[#allocation5 + $0x18] sm:$0xf]
    %v194 = vld [vmem:[#allocation5 + $0x1c] sm:$0xf]
    %v195 = vld [vmem:[#allocation5 + $0x20] sm:$0xf]
    %v196 = vld [vmem:[#allocation5 + $0x24] sm:$0xf]
    %v197 = vld [vmem:[#allocation5 + $0x28] sm:$0xf]
    %v198 = vld [vmem:[#allocation5 + $0x2c] sm:$0xf]
    %v199 = vld [vmem:[#allocation5 + $0x30] sm:$0xf]
    %v200 = vld [vmem:[#allocation5 + $0x34] sm:$0xf]
    %v201 = vld [vmem:[#allocation5 + $0x38] sm:$0xf]
    %v202 = vld [vmem:[#allocation5 + $0x3c] sm:$0xf]
    %v203 = vld [vmem:[%s4] sm:$0x1]
    %v205 = vlaneseq
    %v206 = vshrl.u32 %v205, 7
    %v207 = vsub.s32 0, %v206
    %v208 = vrot.slane %v203, %v207
    %v226 = vunpack.c.l.b16 %v187
    %v227 = vunpack.c.l.b16 %v188
    %v228 = vunpack.c.l.b16 %v189
    %v229 = vunpack.c.l.b16 %v190
    %v230 = vunpack.c.l.b16 %v191
    %v231 = vunpack.c.l.b16 %v192
    %v232 = vunpack.c.l.b16 %v193
    %v233 = vunpack.c.l.b16 %v194
    %v234 = vunpack.c.l.b16 %v195
    %v235 = vunpack.c.l.b16 %v196
    %v236 = vunpack.c.l.b16 %v197
    %v237 = vunpack.c.l.b16 %v198
    %v238 = vunpack.c.l.b16 %v199
    %v239 = vunpack.c.l.b16 %v200
    %v240 = vunpack.c.l.b16 %v201
    %v241 = vunpack.c.l.b16 %v202
    %v242 = vpack.c.b16 %v227, %v226
    %v243 = vpack.c.b16 %v229, %v228
    %v244 = vpack.c.b16 %v231, %v230
    %v245 = vpack.c.b16 %v233, %v232
    %v246 = vpack.c.b16 %v235, %v234
    %v247 = vpack.c.b16 %v237, %v236
    %v248 = vpack.c.b16 %v239, %v238
    %v249 = vpack.c.b16 %v241, %v240
    %258 = vmatprep.subr.bf16.mxu0 0
    %259 = vmatpush1.bf16.msra.mxu0 %v242
    %260 = vmatprep.subr.bf16.mxu0 0
    %261 = vmatpush1.bf16.msra.mxu0 %v243
    %262 = vmatprep.subr.bf16.mxu0 0
    %263 = vmatpush1.bf16.msra.mxu0 %v244
    %264 = vmatprep.subr.bf16.mxu0 0
    %265 = vmatpush1.bf16.msra.mxu0 %v245
    %266 = vmatprep.subr.bf16.mxu0 0
    %267 = vmatpush1.bf16.msra.mxu0 %v246
    %268 = vmatprep.subr.bf16.mxu0 0
    %269 = vmatpush1.bf16.msra.mxu0 %v247
    %270 = vmatprep.subr.bf16.mxu0 0
    %271 = vmatpush1.bf16.msra.mxu0 %v248
    %272 = vmatprep.subr.bf16.mxu0 0
    %273 = vmatpush1.bf16.msra.mxu0 %v249
    %274 = vmatprep.subr.bf16.mxu0 0
    %275 = vmatpush1.bf16.msra.mxu0 0
    %276 = vmatprep.subr.bf16.mxu0 0
    %277 = vmatpush1.bf16.msra.mxu0 0
    %278 = vmatprep.subr.bf16.mxu0 0
    %279 = vmatpush1.bf16.msra.mxu0 0
    %280 = vmatprep.subr.bf16.mxu0 0
    %281 = vmatpush1.bf16.msra.mxu0 0
    %282 = vmatprep.subr.bf16.mxu0 0
    %283 = vmatpush1.bf16.msra.mxu0 0
    %284 = vmatprep.subr.bf16.mxu0 0
    %285 = vmatpush1.bf16.msra.mxu0 0
    %286 = vmatprep.subr.bf16.mxu0 0
    %287 = vmatpush1.bf16.msra.mxu0 0
    %288 = vmatprep.subr.bf16.mxu0 0
    %289 = vmatpush1.bf16.msra.mxu0 0
    %290 = vmatprep.mubr.bf16.mxu0 0
    %291 = vmatmul.mubr.bf16.gmra.mrb[0].mxu0 %v186
    %v292 = vpop.f32.mrb[0].mxu0
    %v293 = vadd.f32 %v208, %v292
    %v294 = vpop.f32.mrb[0].mxu0
    %v295 = vpop.f32.mrb[0].mxu0
    %v296 = vpop.f32.mrb[0].mxu0
    %297 = vdwg.mxu0
    %v298 = vmax.f32 %v293, 0.0
    %v299 = vpack.c.bf16 %v298, %v298
    %v300 = vld [vmem:[#allocation7] sm:$0xf]
    %v301 = vld [vmem:[#allocation7 + $0x4] sm:$0xf]
    %v302 = vld [vmem:[#allocation7 + $0x8] sm:$0xf]
    %v303 = vld [vmem:[#allocation7 + $0xc] sm:$0xf]
    %v304 = vld [vmem:[#allocation7 + $0x10] sm:$0xf]
    %v305 = vld [vmem:[#allocation7 + $0x14] sm:$0xf]
    %v306 = vld [vmem:[#allocation7 + $0x18] sm:$0xf]
    %v307 = vld [vmem:[#allocation7 + $0x1c] sm:$0xf]
    %v308 = vld [vmem:[#allocation7 + $0x20] sm:$0xf]
    %v309 = vld [vmem:[#allocation7 + $0x24] sm:$0xf]
    %v310 = vld [vmem:[#allocation7 + $0x28] sm:$0xf]
    %v311 = vld [vmem:[#allocation7 + $0x2c] sm:$0xf]
    %v312 = vld [vmem:[#allocation7 + $0x30] sm:$0xf]
    %v313 = vld [vmem:[#allocation7 + $0x34] sm:$0xf]
    %v314 = vld [vmem:[#allocation7 + $0x38] sm:$0xf]
    %v315 = vld [vmem:[#allocation7 + $0x3c] sm:$0xf]
    %v316 = vld [vmem:[%s6] sm:$0x1]
    %v318 = vlaneseq
    %v319 = vshrl.u32 %v318, 7
    %v320 = vsub.s32 0, %v319
    %v321 = vrot.slane %v316, %v320
    %v339 = vunpack.c.l.b16 %v300
    %v340 = vunpack.c.l.b16 %v301
    %v341 = vunpack.c.l.b16 %v302
    %v342 = vunpack.c.l.b16 %v303
    %v343 = vunpack.c.l.b16 %v304
    %v344 = vunpack.c.l.b16 %v305
    %v345 = vunpack.c.l.b16 %v306
    %v346 = vunpack.c.l.b16 %v307
    %v347 = vunpack.c.l.b16 %v308
    %v348 = vunpack.c.l.b16 %v309
    %v349 = vunpack.c.l.b16 %v310
    %v350 = vunpack.c.l.b16 %v311
    %v351 = vunpack.c.l.b16 %v312
    %v352 = vunpack.c.l.b16 %v313
    %v353 = vunpack.c.l.b16 %v314
    %v354 = vunpack.c.l.b16 %v315
    %v355 = vpack.c.b16 %v340, %v339
    %v356 = vpack.c.b16 %v342, %v341
    %v357 = vpack.c.b16 %v344, %v343
    %v358 = vpack.c.b16 %v346, %v345
    %v359 = vpack.c.b16 %v348, %v347
    %v360 = vpack.c.b16 %v350, %v349
    %v361 = vpack.c.b16 %v352, %v351
    %v362 = vpack.c.b16 %v354, %v353
    %371 = vmatprep.subr.bf16.mxu0 0
    %372 = vmatpush1.bf16.msra.mxu0 %v355
    %373 = vmatprep.subr.bf16.mxu0 0
    %374 = vmatpush1.bf16.msra.mxu0 %v356
    %375 = vmatprep.subr.bf16.mxu0 0
    %376 = vmatpush1.bf16.msra.mxu0 %v357
    %377 = vmatprep.subr.bf16.mxu0 0
    %378 = vmatpush1.bf16.msra.mxu0 %v358
    %379 = vmatprep.subr.bf16.mxu0 0
    %380 = vmatpush1.bf16.msra.mxu0 %v359
    %381 = vmatprep.subr.bf16.mxu0 0
    %382 = vmatpush1.bf16.msra.mxu0 %v360
    %383 = vmatprep.subr.bf16.mxu0 0
    %384 = vmatpush1.bf16.msra.mxu0 %v361
    %385 = vmatprep.subr.bf16.mxu0 0
    %386 = vmatpush1.bf16.msra.mxu0 %v362
    %387 = vmatprep.subr.bf16.mxu0 0
    %388 = vmatpush1.bf16.msra.mxu0 0
    %389 = vmatprep.subr.bf16.mxu0 0
    %390 = vmatpush1.bf16.msra.mxu0 0
    %391 = vmatprep.subr.bf16.mxu0 0
    %392 = vmatpush1.bf16.msra.mxu0 0
    %393 = vmatprep.subr.bf16.mxu0 0
    %394 = vmatpush1.bf16.msra.mxu0 0
    %395 = vmatprep.subr.bf16.mxu0 0
    %396 = vmatpush1.bf16.msra.mxu0 0
    %397 = vmatprep.subr.bf16.mxu0 0
    %398 = vmatpush1.bf16.msra.mxu0 0
    %399 = vmatprep.subr.bf16.mxu0 0
    %400 = vmatpush1.bf16.msra.mxu0 0
    %401 = vmatprep.subr.bf16.mxu0 0
    %402 = vmatpush1.bf16.msra.mxu0 0
    %403 = vmatprep.mubr.bf16.mxu0 0
    %404 = vmatmul.mubr.bf16.gmra.mrb[0].mxu0 %v299
    %v405 = vpop.f32.mrb[0].mxu0
    %v406 = vadd.f32 %v321, %v405
    %v407 = vpop.f32.mrb[0].mxu0
    %v408 = vpop.f32.mrb[0].mxu0
    %v409 = vpop.f32.mrb[0].mxu0
    %410 = vdwg.mxu0
    %vm411 = vcmask 23552
    %412 = vst.msk [vmem:[%s7] sm:$0xff] %vm411, %v406
    // Predicated region
    $region42: #{mlp_forward.1} parent=1 // pred_check
      _
    $region43: #{mlp_forward.1} parent=1 // pred_check_branch
      %414 = sbr.rel (0) target = $region45
    $region44: #{mlp_forward.1} parent=1 // pred_region
      _
    $region45: #{mlp_forward.1} parent=1 // pred_fallthru
      _
    // Predicated region
    $region46: #{mlp_forward.1} parent=1 // pred_check
      _
    $region47: #{mlp_forward.1} parent=1 // pred_check_branch
      %416 = sbr.rel (0) target = $region49
    $region48: #{mlp_forward.1} parent=1 // pred_region
      _
    $region49: #{mlp_forward.1} parent=1 // pred_fallthru
      _
    %417 = vsyncpa [#allocation4], 1
    %418 = vsyncpa [#allocation6], 1

</llo_original>
